<compile_context>
chip_gen: v5e
topology: v5e:2x2
jax: 0.10.0
libtpu: 0.0.40
codegen_flags: <defaults>
</compile_context>

<pallas_src>
import functools

import jax
import jax.numpy as jnp
from jax.experimental import pallas as pl
from jax.experimental.pallas import tpu as pltpu


def _soft_ce_kernel(pred_ref, target_ref, out_ref, *, n_rows):
    """One grid step: (tile_n, C) logits + soft targets -> (tile_n, 1) row losses."""
    i = pl.program_id(0)
    tile_n = out_ref.shape[0]

    p = pred_ref[...].astype(jnp.float32)      # (tile_n, C)
    t = target_ref[...].astype(jnp.float32)    # (tile_n, C)

    # Numerically-stable logsumexp over the class axis.
    m = jnp.max(p, axis=1, keepdims=True)                                  # (tile_n, 1)
    lse = m + jnp.log(jnp.sum(jnp.exp(p - m), axis=1, keepdims=True))      # (tile_n, 1)

    # sum_c(-t * log_softmax(p)) == sum(t)*logsumexp(p) - sum(t*p)
    # (explicit sum(t) keeps correctness for non-normalized soft targets)
    t_sum = jnp.sum(t, axis=1, keepdims=True)
    tp_sum = jnp.sum(t * p, axis=1, keepdims=True)
    row_loss = t_sum * lse - tp_sum                                        # (tile_n, 1)

    # Mask rows past the true batch size (ragged last block).
    row_ids = i * tile_n + jax.lax.broadcasted_iota(jnp.int32, (tile_n, 1), 0)
    out_ref[...] = jnp.where(row_ids < n_rows, row_loss, 0.0)


def _hard_ce_kernel(pred_ref, label_ref, out_ref, *, n_rows):
    """One grid step: (tile_n, C) logits + (tile_n, 1) int labels -> row losses."""
    i = pl.program_id(0)
    tile_n = out_ref.shape[0]

    p = pred_ref[...].astype(jnp.float32)      # (tile_n, C)
    lab = label_ref[...]                       # (tile_n, 1) int32

    m = jnp.max(p, axis=1, keepdims=True)
    lse = m + jnp.log(jnp.sum(jnp.exp(p - m), axis=1, keepdims=True))

    # Gather p[row, label] via an iota mask (no one-hot materialized anywhere).
    cls = jax.lax.broadcasted_iota(jnp.int32, p.shape, 1)
    p_at_label = jnp.sum(jnp.where(cls == lab, p, 0.0), axis=1, keepdims=True)
    row_loss = lse - p_at_label                # one-hot target: sum(t) == 1

    row_ids = i * tile_n + jax.lax.broadcasted_iota(jnp.int32, (tile_n, 1), 0)
    out_ref[...] = jnp.where(row_ids < n_rows, row_loss, 0.0)


_VMEM_LIMIT_BYTES = 32 * 1024 * 1024    # >= scoped default on v6e/v7x, raises v5e's 16 MiB
_TILE_BUDGET_BYTES = 16 * 1024 * 1024   # double-buffered input working set budget
_MAX_TILE_N = 1024


def _pick_tile_n(n, bytes_per_row):
    """Largest row tile (multiple of 8, <= 1024) whose double-buffered inputs fit budget."""
    t = _TILE_BUDGET_BYTES // max(int(bytes_per_row), 1)
    t = min(int(t), _MAX_TILE_N)
    t = max(8, (t // 8) * 8)
    return n if n <= t else t


@functools.partial(jax.jit, static_argnames=("size_average", "tile_n"))
def cutmix_cross_entropy_loss(pred, target, size_average=True, tile_n=None):
    """JAX/Pallas equivalent of CutMixCrossEntropyLoss.forward.

    pred   : (N, C) float logits (any float dtype; cast to f32 in-kernel)
    target : (N, C) float soft targets, or (N,) int hard labels
    """
    n, c = pred.shape
    hard = target.ndim == 1

    pred_bytes = jnp.dtype(pred.dtype).itemsize
    if hard:
        bytes_per_row = 2 * (c * pred_bytes + 4)                 # logits + (N,1) labels
    else:
        tgt_bytes = jnp.dtype(target.dtype).itemsize
        bytes_per_row = 2 * c * (pred_bytes + tgt_bytes)         # logits + soft targets

    if tile_n is None:
        tile_n = _pick_tile_n(n, bytes_per_row)
    else:
        tile_n = n if int(tile_n) >= n else max(8, (int(tile_n) // 8) * 8)

    num_tiles = pl.cdiv(n, tile_n)
    n_pad = num_tiles * tile_n

    compiler_params = pltpu.CompilerParams(
        dimension_semantics=("parallel",),       # independent output blocks -> shardable
        vmem_limit_bytes=_VMEM_LIMIT_BYTES,
    )
    out_shape = jax.ShapeDtypeStruct((n_pad, 1), jnp.float32)
    out_spec = pl.BlockSpec((tile_n, 1), lambda i: (i, 0))

    if hard:
        labels = target.astype(jnp.int32).reshape(n, 1)
        per_row = pl.pallas_call(
            functools.partial(_hard_ce_kernel, n_rows=n),
            out_shape=out_shape,
            grid_spec=pltpu.PrefetchScalarGridSpec(
                num_scalar_prefetch=0,
                grid=(num_tiles,),
                in_specs=[
                    pl.BlockSpec((tile_n, c), lambda i: (i, 0)),
                    pl.BlockSpec((tile_n, 1), lambda i: (i, 0)),
                ],
                out_specs=out_spec,
            ),
            compiler_params=compiler_params,
        )(pred, labels)
    else:
        per_row = pl.pallas_call(
            functools.partial(_soft_ce_kernel, n_rows=n),
            out_shape=out_shape,
            grid_spec=pltpu.PrefetchScalarGridSpec(
                num_scalar_prefetch=0,
                grid=(num_tiles,),
                in_specs=[
                    pl.BlockSpec((tile_n, c), lambda i: (i, 0)),
                    pl.BlockSpec((tile_n, c), lambda i: (i, 0)),
                ],
                out_specs=out_spec,
            ),
            compiler_params=compiler_params,
        )(pred, target)

    loss_sum = jnp.sum(per_row)                   # padded rows contribute exactly 0
    if size_average:
        return loss_sum / jnp.float32(n)
    return loss_sum


def _reference(pred, target, size_average=True):
    """Pure-JAX reference mirroring the PyTorch module."""
    if target.ndim == 1:
        target = jax.nn.one_hot(target, num_classes=pred.shape[-1], dtype=jnp.float32)
    logsm = jax.nn.log_softmax(pred.astype(jnp.float32), axis=1)
    per_row = jnp.sum(-target.astype(jnp.float32) * logsm, axis=1)
    return jnp.mean(per_row) if size_average else jnp.sum(per_row)


if __name__ == "__main__":
    key = jax.random.PRNGKey(0)
    k1, k2, k3, k4 = jax.random.split(key, 4)

    N, C = 16, 32
    pred = jax.random.normal(k1, (N, C), dtype=jnp.float32) * 2.0

    # Soft targets (CutMix-style mixture of two one-hots).
    lam = 0.7
    labels_a = jax.random.randint(k2, (N,), 0, C)
    labels_b = jax.random.randint(k3, (N,), 0, C)
    soft_target = (lam * jax.nn.one_hot(labels_a, C)
                   + (1.0 - lam) * jax.nn.one_hot(labels_b, C)).astype(jnp.float32)

    # Soft-target path (size_average=True -> mean).
    out_soft = jax.block_until_ready(
        cutmix_cross_entropy_loss(pred, soft_target, size_average=True))
    ref_soft = _reference(pred, soft_target, size_average=True)
    assert jnp.allclose(out_soft, ref_soft, atol=1e-5, rtol=1e-5), (out_soft, ref_soft)

    # Hard-label path (no one-hot materialized; in-kernel gather).
    out_hard = jax.block_until_ready(
        cutmix_cross_entropy_loss(pred, labels_a, size_average=True))
    ref_hard = _reference(pred, labels_a, size_average=True)
    assert jnp.allclose(out_hard, ref_hard, atol=1e-5, rtol=1e-5), (out_hard, ref_hard)

    # size_average=False path (sum instead of mean).
    out_sum = jax.block_until_ready(
        cutmix_cross_entropy_loss(pred, soft_target, size_average=False))
    ref_sum = _reference(pred, soft_target, size_average=False)
    assert jnp.allclose(out_sum, ref_sum, atol=1e-4, rtol=1e-5), (out_sum, ref_sum)

    # Ragged batch: N not a multiple of tile_n -> cdiv grid + row masking.
    N2, C2 = 20, 48
    pred2 = jax.random.normal(k4, (N2, C2), dtype=jnp.float32)
    labels2 = jax.random.randint(k2, (N2,), 0, C2)
    soft2 = (jax.nn.one_hot(labels2, C2) * 0.9 + 0.1 / C2).astype(jnp.float32)

    out2 = jax.block_until_ready(
        cutmix_cross_entropy_loss(pred2, soft2, size_average=True, tile_n=8))
    ref2 = _reference(pred2, soft2, size_average=True)
    assert jnp.allclose(out2, ref2, atol=1e-5, rtol=1e-5), (out2, ref2)

    out2h = jax.block_until_ready(
        cutmix_cross_entropy_loss(pred2, labels2, size_average=True, tile_n=8))
    ref2h = _reference(pred2, labels2, size_average=True)
    assert jnp.allclose(out2h, ref2h, atol=1e-5, rtol=1e-5), (out2h, ref2h)

    # bf16 logits are streamed as-is (no wrapper up-cast) and cast in-kernel.
    pred_bf16 = pred.astype(jnp.bfloat16)
    out_bf = jax.block_until_ready(cutmix_cross_entropy_loss(pred_bf16, soft_target))
    ref_bf = _reference(pred_bf16, soft_target)
    assert jnp.allclose(out_bf, ref_bf, atol=1e-4, rtol=1e-4), (out_bf, ref_bf)

    print("KERNEL_OK")
</pallas_src>

<mosaic_0001>
module attributes {stable_mosaic.version = 11 : i64} {
  func.func @_soft_ce_kernel(%arg0: i32, %arg1: memref<16x32xf32, #tpu.memory_space<vmem>>, %arg2: memref<16x32xf32, #tpu.memory_space<vmem>>, %arg3: memref<16x1xf32, #tpu.memory_space<vmem>>) attributes {dimension_semantics = [#tpu.dimension_semantics<parallel>], iteration_bounds = array<i64: 1>, scalar_prefetch = 0 : i64, scratch_operands = 0 : i64, tpu.core_type = #tpu.core_type<tc>, window_params = [{transform_indices = @transform_0, window_bounds = array<i64: 16, 32>}, {transform_indices = @transform_1, window_bounds = array<i64: 16, 32>}, {transform_indices = @transform_2, window_bounds = array<i64: 16, 1>}]} {
    %c0 = arith.constant 0 : index
    %c0_0 = arith.constant 0 : index
    %0 = vector.load %arg1[%c0, %c0_0] : memref<16x32xf32, #tpu.memory_space<vmem>>, vector<16x32xf32>
    %c0_1 = arith.constant 0 : index
    %c0_2 = arith.constant 0 : index
    %1 = vector.load %arg2[%c0_1, %c0_2] : memref<16x32xf32, #tpu.memory_space<vmem>>, vector<16x32xf32>
    %cst = arith.constant dense<0xFF800000> : vector<16xf32>
    %2 = vector.multi_reduction <maximumf>, %0, %cst [1] : vector<16x32xf32> to vector<16xf32>
    %3 = vector.shape_cast %2 : vector<16xf32> to vector<16x1xf32>
    %4 = vector.broadcast %3 : vector<16x1xf32> to vector<16x32xf32>
    %5 = arith.subf %0, %4 : vector<16x32xf32>
    %6 = math.exp %5 : vector<16x32xf32>
    %cst_3 = arith.constant dense<0.000000e+00> : vector<16xf32>
    %7 = vector.multi_reduction <add>, %6, %cst_3 [1] : vector<16x32xf32> to vector<16xf32>
    %8 = vector.shape_cast %7 : vector<16xf32> to vector<16x1xf32>
    %9 = math.log %8 : vector<16x1xf32>
    %10 = arith.addf %3, %9 : vector<16x1xf32>
    %cst_4 = arith.constant dense<0.000000e+00> : vector<16xf32>
    %11 = vector.multi_reduction <add>, %1, %cst_4 [1] : vector<16x32xf32> to vector<16xf32>
    %12 = vector.shape_cast %11 : vector<16xf32> to vector<16x1xf32>
    %13 = arith.mulf %1, %0 : vector<16x32xf32>
    %cst_5 = arith.constant dense<0.000000e+00> : vector<16xf32>
    %14 = vector.multi_reduction <add>, %13, %cst_5 [1] : vector<16x32xf32> to vector<16xf32>
    %15 = vector.shape_cast %14 : vector<16xf32> to vector<16x1xf32>
    %16 = arith.mulf %12, %10 : vector<16x1xf32>
    %17 = arith.subf %16, %15 : vector<16x1xf32>
    %c16_i32 = arith.constant 16 : i32
    %18 = arith.muli %arg0, %c16_i32 : i32
    %19 = tpu.iota {dimensions = array<i32: 0>} : vector<16x1xi32>
    %20 = vector.broadcast %18 : i32 to vector<16x1xi32>
    %21 = arith.addi %20, %19 : vector<16x1xi32>
    %c16_i32_6 = arith.constant 16 : i32
    %22 = vector.broadcast %c16_i32_6 : i32 to vector<16x1xi32>
    %23 = arith.cmpi slt, %21, %22 : vector<16x1xi32>
    %cst_7 = arith.constant 0.000000e+00 : f32
    %24 = vector.broadcast %cst_7 : f32 to vector<16x1xf32>
    %25 = arith.select %23, %17, %24 : vector<16x1xi1>, vector<16x1xf32>
    %c0_8 = arith.constant 0 : index
    %c0_9 = arith.constant 0 : index
    %26 = vector.load %arg3[%c0_8, %c0_9] : memref<16x1xf32, #tpu.memory_space<vmem>>, vector<16x1xf32>
    tpu.vector_store %arg3[%c0_8, %c0_9], %25 {strides = array<i32>} : memref<16x1xf32, #tpu.memory_space<vmem>>, vector<16x1xf32>,
    return
  }
  func.func @transform_0(%arg0: i32) -> (i32, i32) {
    %c0_i32 = arith.constant 0 : i32
    %c0_i32_0 = arith.constant 0 : i32
    return %arg0, %c0_i32 : i32, i32
  }
  func.func @transform_1(%arg0: i32) -> (i32, i32) {
    %c0_i32 = arith.constant 0 : i32
    %c0_i32_0 = arith.constant 0 : i32
    return %arg0, %c0_i32 : i32, i32
  }
  func.func @transform_2(%arg0: i32) -> (i32, i32) {
    %c0_i32 = arith.constant 0 : i32
    %c0_i32_0 = arith.constant 0 : i32
    return %arg0, %c0_i32 : i32, i32
  }
}

</mosaic_0001>

<llo_original>
// kernel: cutmix_cross_entropy_loss.1
$region0: #{cutmix_cross_entropy_loss.1}
  #allocation0 [shape = 'u32[]', space=smem, size = 0x4, offset = 0x4, fixed_abs, tag = 'smem constant byte address 0x4 - core index']
  #allocation1 [shape = 'u32[72,128]{1,0:T(1,128)}', space=vmem, size = 0x9000, scoped, tag = 'internal scratch']
  %s0 = inlined_call_operand.hbm [shape: f32[16,32], index: 0, kind: input, shape index: {}]
  %s1 = inlined_call_operand.hbm [shape: f32[16,32], index: 1, kind: input, shape index: {}]
  %s2 = inlined_call_operand.vmem [shape: f32[16,1], index: 2, kind: output, shape index: {}]
  %s3 = sld [smem:[#allocation0]]
  $region26: #{cutmix_cross_entropy_loss.1} parent=0
    _
  %s5 = ssub.s32 1, %s3
  %s6 = scalar_select 0, %s5, %s3
  $region1: #{cutmix_cross_entropy_loss.1} parent=0
    #allocation2 [shape = 'u8[8192]{0}', space=vmem, size = 0x2000, scoped, tag = 'input window, operand 0, single buffered']
    #allocation3 [shape = 's32[1]{0}', space=sflag, size = 0x4, scoped, tag = 'scoped memory for cutmix_cross_entropy_loss.1']
    #allocation4 [shape = 'u8[8192]{0}', space=vmem, size = 0x2000, scoped, tag = 'input window, operand 1, single buffered']
    #allocation5 [shape = 's32[1]{0}', space=sflag, size = 0x4, scoped, tag = 'scoped memory for cutmix_cross_entropy_loss.1']
    %7 = vsyncpa [#allocation3], 0
    %8 = vsyncpa [#allocation5], 0
    // Predicated region
    $region2: #{cutmix_cross_entropy_loss.1} parent=1 // pred_check
      _
    $region3: #{cutmix_cross_entropy_loss.1} parent=1 // pred_check_branch
      %10 = sbr.rel (0) target = $region5
    $region4: #{cutmix_cross_entropy_loss.1} parent=1 // pred_region
      %12 = vsyncadd [#allocation3], 0
      %s13 = sshll.u32 %s0, 4
      %s14 = int_to_ptr.hbm [resolvable:$true] %s13
      %s15 = sshll.u32 [#allocation2], 4
      %s16 = int_to_ptr.vmem [resolvable:$true] %s15
      %21 = dma.hbm_to_vmem [thread:$0]  %s14, 256, %s16, [#allocation3], 128, 128, 8
    $region5: #{cutmix_cross_entropy_loss.1} parent=1 // pred_fallthru
      _
    // Predicated region
    $region6: #{cutmix_cross_entropy_loss.1} parent=1 // pred_check
      _
    $region7: #{cutmix_cross_entropy_loss.1} parent=1 // pred_check_branch
      %23 = sbr.rel (0) target = $region9
    $region8: #{cutmix_cross_entropy_loss.1} parent=1 // pred_region
      %25 = vsyncadd [#allocation5], 0
      %s26 = sshll.u32 %s1, 4
      %s27 = int_to_ptr.hbm [resolvable:$true] %s26
      %s28 = sshll.u32 [#allocation4], 4
      %s29 = int_to_ptr.vmem [resolvable:$true] %s28
      %34 = dma.hbm_to_vmem [thread:$0]  %s27, 256, %s29, [#allocation5], 128, 128, 8
    $region9: #{cutmix_cross_entropy_loss.1} parent=1 // pred_fallthru
      _
    // Predicated region
    $region10: #{cutmix_cross_entropy_loss.1} parent=1 // pred_check
      _
    $region11: #{cutmix_cross_entropy_loss.1} parent=1 // pred_check_branch
      %36 = sbr.rel (0) target = $region13
    $region12: #{cutmix_cross_entropy_loss.1} parent=1 // pred_region
      %38 = dma.done [#allocation3], 256
    $region13: #{cutmix_cross_entropy_loss.1} parent=1 // pred_fallthru
      _
    // Predicated region
    $region14: #{cutmix_cross_entropy_loss.1} parent=1 // pred_check
      _
    $region15: #{cutmix_cross_entropy_loss.1} parent=1 // pred_check_branch
      %40 = sbr.rel (0) target = $region17
    $region16: #{cutmix_cross_entropy_loss.1} parent=1 // pred_region
      %42 = dma.done [#allocation5], 256
    $region17: #{cutmix_cross_entropy_loss.1} parent=1 // pred_fallthru
      _
    %v43 = vld [vmem:[#allocation2] sm:$0xff]
    %v44 = vld [vmem:[#allocation2 + $0x8] sm:$0xff]
    %v45 = vld [vmem:[#allocation4] sm:$0xff]
    %v46 = vld [vmem:[#allocation4 + $0x8] sm:$0xff]
    %vm47 = vcmask 261120
    %v48 = vsel %vm47, %v43, -inf
    %49 = vmax.xlane.f32.xlu0 %v48
    %v50 = vpop.xlane.xlu0 %49
    %v51 = vsel %vm47, %v44, -inf
    %52 = vmax.xlane.f32.xlu0 %v51
    %v53 = vpop.xlane.xlu0 %52
    %v54 = vsub.f32 %v43, %v50
    %v55 = vsub.f32 %v44, %v53
    %v56 = vmul.f32 %v54, 1.442695
    %v57 = vpow.pop %v56
    %v58 = vmul.f32 %v55, 1.442695
    %v59 = vpow.pop %v58
    %v60 = vsel %vm47, %v57, 0.0
    %61 = vadd.xlane.f32.xlu0 %v60
    %v62 = vpop.xlane.xlu0 %61
    %v63 = vsel %vm47, %v59, 0.0
    %64 = vadd.xlane.f32.xlu0 %v63
    %v65 = vpop.xlane.xlu0 %64
    %v66 = vlog2.pop %v62
    %v67 = vmul.f32 %v66, 0.6931472
    %v68 = vlog2.pop %v65
    %v69 = vmul.f32 %v68, 0.6931472
    %v70 = vadd.f32 %v50, %v67
    %v71 = vadd.f32 %v53, %v69
    %v72 = vsel %vm47, %v45, 0.0
    %73 = vadd.xlane.f32.xlu0 %v72
    %v74 = vpop.xlane.xlu0 %73
    %v75 = vsel %vm47, %v46, 0.0
    %76 = vadd.xlane.f32.xlu0 %v75
    %v77 = vpop.xlane.xlu0 %76
    %v78 = vmul.f32 %v45, %v43
    %v79 = vmul.f32 %v46, %v44
    %v80 = vsel %vm47, %v78, 0.0
    %81 = vadd.xlane.f32.xlu0 %v80
    %v82 = vpop.xlane.xlu0 %81
    %v83 = vsel %vm47, %v79, 0.0
    %84 = vadd.xlane.f32.xlu0 %v83
    %v85 = vpop.xlane.xlu0 %84
    %v86 = vmul.f32 %v74, %v70
    %v87 = vmul.f32 %v77, %v71
    %v88 = vsub.f32 %v86, %v82
    %v89 = vsub.f32 %v87, %v85
    %s90 = smul.u32 0, 16
    %v91 = vlaneseq
    %v92 = vshrl.u32 %v91, 7
    %v93 = vadd.s32 %v92, 8
    %v94 = vstv %s90
    %v95 = vadd.s32 %v94, %v92
    %v96 = vadd.s32 %v94, %v93
    %vm97 = vcmp.lt.s32.totalorder %v95, 16
    %vm98 = vcmp.lt.s32.totalorder %v96, 16
    %v99 = vsel %vm97, %v88, 0.0
    %v100 = vsel %vm98, %v89, 0.0
    %vm101 = vcmask 7168
    %102 = vst.msk [vmem:[%s2] sm:$0xff] %vm101, %v99
    %103 = vst.msk [vmem:[%s2 + $0x8] sm:$0xff] %vm101, %v100
    // Predicated region
    $region18: #{cutmix_cross_entropy_loss.1} parent=1 // pred_check
      _
    $region19: #{cutmix_cross_entropy_loss.1} parent=1 // pred_check_branch
      %105 = sbr.rel (0) target = $region21
    $region20: #{cutmix_cross_entropy_loss.1} parent=1 // pred_region
      _
    $region21: #{cutmix_cross_entropy_loss.1} parent=1 // pred_fallthru
      _
    // Predicated region
    $region22: #{cutmix_cross_entropy_loss.1} parent=1 // pred_check
      _
    $region23: #{cutmix_cross_entropy_loss.1} parent=1 // pred_check_branch
      %107 = sbr.rel (0) target = $region25
    $region24: #{cutmix_cross_entropy_loss.1} parent=1 // pred_region
      _
    $region25: #{cutmix_cross_entropy_loss.1} parent=1 // pred_fallthru
      _
    %108 = vsyncpa [#allocation3], 1
    %109 = vsyncpa [#allocation5], 1

</llo_original>
